<compile_context>
chip_gen: v7x
topology: tpu7x:2x2x1
jax: 0.10.0
libtpu: 0.0.40
codegen_flags: <defaults>
</compile_context>

<pallas_src>
import jax
import jax.numpy as jnp
from jax.experimental import pallas as pl
from jax.experimental.pallas import tpu as pltpu

# bf16 operands for the MXU (with f32 accumulation) halve the HBM traffic of
# the dominant patch stream on v6e/v7x.  Set to jnp.float32 for bit-exact f32.
MATMUL_DTYPE = jnp.bfloat16
VMEM_LIMIT_BYTES = 32 * 1024 * 1024   # fits default scoped VMEM on v5e/v6e/v7x


# ----------------------------------------------------------------------------
# Pallas kernels
# ----------------------------------------------------------------------------
def _conv_stats_kernel(p_ref, w_ref, y_ref, sum_ref, sq_ref):
    """Fused conv-as-matmul + per-channel sum / sum-of-squares.

    p_ref:   (K, tm)    im2col patches, transposed (lane axis = flattened M)
    w_ref:   (Cout, K)  conv weights
    y_ref:   (Cout, tm) conv output tile (bias-free)
    sum_ref: (Cout, 1)  running per-channel sum        (resident accumulator)
    sq_ref:  (Cout, 1)  running per-channel sum of x^2 (resident accumulator)

    Zero-padded M columns contribute 0 to both sums, so the host side just
    divides by the true element count M.
    """
    @pl.when(pl.program_id(0) == 0)
    def _():
        sum_ref[...] = jnp.zeros_like(sum_ref)
        sq_ref[...] = jnp.zeros_like(sq_ref)

    y = jnp.dot(w_ref[...], p_ref[...], preferred_element_type=jnp.float32)
    y_ref[...] = y
    sum_ref[...] += jnp.sum(y, axis=1, keepdims=True)
    sq_ref[...] += jnp.sum(y * y, axis=1, keepdims=True)


def _bn_relu_kernel(y_ref, scale_ref, shift_ref, o_ref):
    # y_ref: (Cout, tm); scale/shift: (Cout, 1) broadcast across lanes.
    o_ref[...] = jnp.maximum(y_ref[...] * scale_ref[...] + shift_ref[...], 0.0)


# ----------------------------------------------------------------------------
# pallas_call wrappers
# ----------------------------------------------------------------------------
def conv_with_stats(patches_t, w_t, tm):
    """y = w_t @ patches_t, with fused per-channel (sum, sum of squares)."""
    K, Mp = patches_t.shape
    Cout = w_t.shape[0]
    return pl.pallas_call(
        _conv_stats_kernel,
        out_shape=(
            jax.ShapeDtypeStruct((Cout, Mp), jnp.float32),
            jax.ShapeDtypeStruct((Cout, 1), jnp.float32),
            jax.ShapeDtypeStruct((Cout, 1), jnp.float32),
        ),
        grid=(Mp // tm,),
        in_specs=[
            pl.BlockSpec((K, tm), lambda i: (0, i)),
            pl.BlockSpec((Cout, K), lambda i: (0, 0)),
        ],
        out_specs=(
            pl.BlockSpec((Cout, tm), lambda i: (0, i)),
            pl.BlockSpec((Cout, 1), lambda i: (0, 0)),   # resident accumulator
            pl.BlockSpec((Cout, 1), lambda i: (0, 0)),   # resident accumulator
        ),
        compiler_params=pltpu.CompilerParams(
            dimension_semantics=("arbitrary",),   # stats reduce over this axis
            vmem_limit_bytes=VMEM_LIMIT_BYTES,
        ),
    )(patches_t, w_t)


def bn_relu(y_t, scale, shift, tm):
    """Per-channel affine + ReLU, lane-dense (Cout, tm) tiles."""
    Cout, Mp = y_t.shape
    return pl.pallas_call(
        _bn_relu_kernel,
        out_shape=jax.ShapeDtypeStruct((Cout, Mp), jnp.float32),
        grid=(Mp // tm,),
        in_specs=[
            pl.BlockSpec((Cout, tm), lambda i: (0, i)),
            pl.BlockSpec((Cout, 1), lambda i: (0, 0)),
            pl.BlockSpec((Cout, 1), lambda i: (0, 0)),
        ],
        out_specs=pl.BlockSpec((Cout, tm), lambda i: (0, i)),
        compiler_params=pltpu.CompilerParams(
            dimension_semantics=("parallel",),    # shard across 2 TCs on v7x
            vmem_limit_bytes=VMEM_LIMIT_BYTES,
        ),
    )(y_t, scale, shift)


# ----------------------------------------------------------------------------
# Glue: transposed im2col + parameter plumbing + BN statistics math
# ----------------------------------------------------------------------------
def _im2col_3x3_t(x_cnhw, pad):
    """3x3 / stride-1 patches, channels-first: (C,N,H,W) -> (9*C, N*OH*OW)."""
    C, N, H, W = x_cnhw.shape
    xp = jnp.pad(x_cnhw, ((0, 0), (0, 0), (pad, pad), (pad, pad)))
    OH = H + 2 * pad - 2
    OW = W + 2 * pad - 2
    taps = [xp[:, :, kh:kh + OH, kw:kw + OW]
            for kh in range(3) for kw in range(3)]
    p = jnp.stack(taps, axis=0)                        # (9, C, N, OH, OW)
    # TODO(synk): the patch matrix is still materialized by XLA in HBM;
    # assembling the 9 taps in-kernel from row bands would cut that traffic.
    return p.reshape(9 * C, N * OH * OW), (N, OH, OW)


def conv_bn_relu_block(x_cnhw, w, gamma, beta, pad, eps=1e-5):
    """Conv2d(3x3, s=1, pad) + BatchNorm2d(batch stats) + ReLU, channels-first."""
    Cout = w.shape[0]
    patches_t, (N, OH, OW) = _im2col_3x3_t(x_cnhw, pad)
    K, M = patches_t.shape

    # Large lane-dense row tiles; one pad here, one slice at the very end.
    tm = min(1024, pl.cdiv(M, 128) * 128)
    Mp = pl.cdiv(M, tm) * tm
    patches_t = jnp.pad(patches_t, ((0, 0), (0, Mp - M))).astype(MATMUL_DTYPE)

    # PyTorch weight (Cout, Cin, kh, kw) -> (Cout, 9*Cin) matching patch rows.
    w_t = jnp.transpose(w, (0, 2, 3, 1)).reshape(Cout, K).astype(MATMUL_DTYPE)

    y_t, s, sq = conv_with_stats(patches_t, w_t, tm)    # fused conv + stats

    # BatchNorm (training mode): biased batch variance, eps=1e-5.
    mean = s / M
    var = jnp.maximum(sq / M - mean * mean, 0.0)        # guard cancellation
    scale = gamma.reshape(Cout, 1) * jax.lax.rsqrt(var + eps)
    shift = beta.reshape(Cout, 1) - mean * scale

    a_t = bn_relu(y_t, scale, shift, tm)                # (Cout, Mp)
    return a_t[:, :M].reshape(Cout, N, OH, OW)


def conv_block1_forward(x_nchw, params):
    """Full conv_block1 forward. Input/output are NCHW like PyTorch."""
    (w1, b1, g1, be1, w2, b2, g2, be2) = params
    # b1/b2 (conv biases) are exactly cancelled by the batch-mean subtraction
    # of the following BatchNorm, so they are intentionally unused.
    del b1, b2
    x = jnp.transpose(x_nchw, (1, 0, 2, 3))        # NCHW -> CNHW (channels first)
    x = conv_bn_relu_block(x, w1, g1, be1, pad=2)
    x = conv_bn_relu_block(x, w2, g2, be2, pad=1)
    return jnp.transpose(x, (1, 0, 2, 3))          # CNHW -> NCHW
    # TODO(synk): BatchNorm running-stat updates (training side effect) are
    # not modeled; only the forward activation math is reproduced.


# ----------------------------------------------------------------------------
# Main
# ----------------------------------------------------------------------------
if __name__ == "__main__":
    key = jax.random.PRNGKey(0)
    ch_in, ch_out = 4, 8
    N, H, W = 2, 16, 16

    k_x, k_w1, k_b1, k_w2, k_b2 = jax.random.split(key, 5)
    x = jax.random.normal(k_x, (N, ch_in, H, W), jnp.float32)

    # Deterministic parameter init (shapes per nn.Conv2d / nn.BatchNorm2d).
    w1 = 0.1 * jax.random.normal(k_w1, (ch_out, ch_in, 3, 3), jnp.float32)
    b1 = 0.1 * jax.random.normal(k_b1, (ch_out,), jnp.float32)
    w2 = 0.1 * jax.random.normal(k_w2, (ch_out, ch_out, 3, 3), jnp.float32)
    b2 = 0.1 * jax.random.normal(k_b2, (ch_out,), jnp.float32)
    g1 = jnp.ones((ch_out,), jnp.float32)    # BatchNorm default weight
    be1 = jnp.zeros((ch_out,), jnp.float32)  # BatchNorm default bias
    g2 = jnp.ones((ch_out,), jnp.float32)
    be2 = jnp.zeros((ch_out,), jnp.float32)

    params = (w1, b1, g1, be1, w2, b2, g2, be2)
    out = jax.jit(conv_block1_forward)(x, params)
    out = jax.block_until_ready(out)

    # padding=2 on the first conv grows spatial dims by 2; second conv keeps them.
    assert out.shape == (N, ch_out, H + 2, W + 2), out.shape
    assert out.dtype == jnp.float32
    assert bool(jnp.all(out >= 0.0))         # ReLU output
    assert bool(jnp.all(jnp.isfinite(out)))
    print("KERNEL_OK")
</pallas_src>

<mosaic_0001>
module attributes {stable_mosaic.version = 11 : i64} {
  func.func @_conv_stats_kernel(%arg0: i32, %arg1: memref<36x768xbf16, #tpu.memory_space<vmem>>, %arg2: memref<8x36xbf16, #tpu.memory_space<vmem>>, %arg3: memref<8x768xf32, #tpu.memory_space<vmem>>, %arg4: memref<8x1xf32, #tpu.memory_space<vmem>>, %arg5: memref<8x1xf32, #tpu.memory_space<vmem>>) attributes {dimension_semantics = [#tpu.dimension_semantics<arbitrary>], iteration_bounds = array<i64: 1>, scalar_prefetch = 0 : i64, scratch_operands = 0 : i64, tpu.core_type = #tpu.core_type<tc>, window_params = [{transform_indices = @transform_0, window_bounds = array<i64: 36, 768>}, {pipeline_mode = #tpu.pipeline_mode<synchronous>, transform_indices = @transform_1, window_bounds = array<i64: 8, 36>}, {transform_indices = @transform_2, window_bounds = array<i64: 8, 768>}, {pipeline_mode = #tpu.pipeline_mode<synchronous>, transform_indices = @transform_3, window_bounds = array<i64: 8, 1>}, {pipeline_mode = #tpu.pipeline_mode<synchronous>, transform_indices = @transform_4, window_bounds = array<i64: 8, 1>}]} {
    %c0_i32 = arith.constant 0 : i32
    %0 = arith.cmpi eq, %arg0, %c0_i32 : i32
    %1 = arith.extui %0 : i1 to i32
    %c0_i32_0 = arith.constant 0 : i32
    %2 = arith.cmpi ne, %1, %c0_i32_0 : i32
    scf.if %2 {
      %cst_16 = arith.constant 0.000000e+00 : f32
      %18 = vector.broadcast %cst_16 : f32 to vector<8x1xf32>
      %c0_17 = arith.constant 0 : index
      %c0_18 = arith.constant 0 : index
      %19 = vector.load %arg4[%c0_17, %c0_18] : memref<8x1xf32, #tpu.memory_space<vmem>>, vector<8x1xf32>
      tpu.vector_store %arg4[%c0_17, %c0_18], %18 {strides = array<i32>} : memref<8x1xf32, #tpu.memory_space<vmem>>, vector<8x1xf32>,
      %cst_19 = arith.constant 0.000000e+00 : f32
      %20 = vector.broadcast %cst_19 : f32 to vector<8x1xf32>
      %c0_20 = arith.constant 0 : index
      %c0_21 = arith.constant 0 : index
      %21 = vector.load %arg5[%c0_20, %c0_21] : memref<8x1xf32, #tpu.memory_space<vmem>>, vector<8x1xf32>
      tpu.vector_store %arg5[%c0_20, %c0_21], %20 {strides = array<i32>} : memref<8x1xf32, #tpu.memory_space<vmem>>, vector<8x1xf32>,
    } else {
    }
    %c0 = arith.constant 0 : index
    %c0_1 = arith.constant 0 : index
    %3 = vector.load %arg2[%c0, %c0_1] : memref<8x36xbf16, #tpu.memory_space<vmem>>, vector<8x36xbf16>
    %c0_2 = arith.constant 0 : index
    %c0_3 = arith.constant 0 : index
    %4 = vector.load %arg1[%c0_2, %c0_3] : memref<36x768xbf16, #tpu.memory_space<vmem>>, vector<36x768xbf16>
    %cst = arith.constant dense<0.000000e+00> : vector<8x768xf32>
    %5 = tpu.matmul %3, %4, %cst {dimension_numbers = #tpu.dot_dimension_numbers<[1], [0], [0], [1], [0, 0, 1, 1], [], []>} : vector<8x36xbf16>, vector<36x768xbf16>, vector<8x768xf32> -> vector<8x768xf32>
    %c0_4 = arith.constant 0 : index
    %c0_5 = arith.constant 0 : index
    %6 = vector.load %arg3[%c0_4, %c0_5] : memref<8x768xf32, #tpu.memory_space<vmem>>, vector<8x768xf32>
    tpu.vector_store %arg3[%c0_4, %c0_5], %5 {strides = array<i32>} : memref<8x768xf32, #tpu.memory_space<vmem>>, vector<8x768xf32>,
    %c0_6 = arith.constant 0 : index
    %c0_7 = arith.constant 0 : index
    %7 = vector.load %arg4[%c0_6, %c0_7] : memref<8x1xf32, #tpu.memory_space<vmem>>, vector<8x1xf32>
    %cst_8 = arith.constant dense<0.000000e+00> : vector<8xf32>
    %8 = vector.multi_reduction <add>, %5, %cst_8 [1] : vector<8x768xf32> to vector<8xf32>
    %9 = vector.shape_cast %8 : vector<8xf32> to vector<8x1xf32>
    %10 = arith.addf %7, %9 : vector<8x1xf32>
    %c0_9 = arith.constant 0 : index
    %c0_10 = arith.constant 0 : index
    %11 = vector.load %arg4[%c0_9, %c0_10] : memref<8x1xf32, #tpu.memory_space<vmem>>, vector<8x1xf32>
    tpu.vector_store %arg4[%c0_9, %c0_10], %10 {strides = array<i32>} : memref<8x1xf32, #tpu.memory_space<vmem>>, vector<8x1xf32>,
    %c0_11 = arith.constant 0 : index
    %c0_12 = arith.constant 0 : index
    %12 = vector.load %arg5[%c0_11, %c0_12] : memref<8x1xf32, #tpu.memory_space<vmem>>, vector<8x1xf32>
    %13 = arith.mulf %5, %5 : vector<8x768xf32>
    %cst_13 = arith.constant dense<0.000000e+00> : vector<8xf32>
    %14 = vector.multi_reduction <add>, %13, %cst_13 [1] : vector<8x768xf32> to vector<8xf32>
    %15 = vector.shape_cast %14 : vector<8xf32> to vector<8x1xf32>
    %16 = arith.addf %12, %15 : vector<8x1xf32>
    %c0_14 = arith.constant 0 : index
    %c0_15 = arith.constant 0 : index
    %17 = vector.load %arg5[%c0_14, %c0_15] : memref<8x1xf32, #tpu.memory_space<vmem>>, vector<8x1xf32>
    tpu.vector_store %arg5[%c0_14, %c0_15], %16 {strides = array<i32>} : memref<8x1xf32, #tpu.memory_space<vmem>>, vector<8x1xf32>,
    return
  }
  func.func @transform_0(%arg0: i32) -> (i32, i32) {
    %c0_i32 = arith.constant 0 : i32
    %c0_i32_0 = arith.constant 0 : i32
    return %c0_i32, %arg0 : i32, i32
  }
  func.func @transform_1(%arg0: i32) -> (i32, i32) {
    %c0_i32 = arith.constant 0 : i32
    %c0_i32_0 = arith.constant 0 : i32
    %c0_i32_1 = arith.constant 0 : i32
    return %c0_i32, %c0_i32_0 : i32, i32
  }
  func.func @transform_2(%arg0: i32) -> (i32, i32) {
    %c0_i32 = arith.constant 0 : i32
    %c0_i32_0 = arith.constant 0 : i32
    return %c0_i32, %arg0 : i32, i32
  }
  func.func @transform_3(%arg0: i32) -> (i32, i32) {
    %c0_i32 = arith.constant 0 : i32
    %c0_i32_0 = arith.constant 0 : i32
    %c0_i32_1 = arith.constant 0 : i32
    return %c0_i32, %c0_i32_0 : i32, i32
  }
  func.func @transform_4(%arg0: i32) -> (i32, i32) {
    %c0_i32 = arith.constant 0 : i32
    %c0_i32_0 = arith.constant 0 : i32
    %c0_i32_1 = arith.constant 0 : i32
    return %c0_i32, %c0_i32_0 : i32, i32
  }
}

module attributes {stable_mosaic.version = 11 : i64} {
  func.func @_bn_relu_kernel(%arg0: i32, %arg1: memref<8x768xf32, #tpu.memory_space<vmem>>, %arg2: memref<8x1xf32, #tpu.memory_space<vmem>>, %arg3: memref<8x1xf32, #tpu.memory_space<vmem>>, %arg4: memref<8x768xf32, #tpu.memory_space<vmem>>) attributes {dimension_semantics = [#tpu.dimension_semantics<parallel>], iteration_bounds = array<i64: 1>, scalar_prefetch = 0 : i64, scratch_operands = 0 : i64, tpu.core_type = #tpu.core_type<tc>, window_params = [{transform_indices = @transform_0, window_bounds = array<i64: 8, 768>}, {pipeline_mode = #tpu.pipeline_mode<synchronous>, transform_indices = @transform_1, window_bounds = array<i64: 8, 1>}, {pipeline_mode = #tpu.pipeline_mode<synchronous>, transform_indices = @transform_2, window_bounds = array<i64: 8, 1>}, {transform_indices = @transform_3, window_bounds = array<i64: 8, 768>}]} {
    %c0 = arith.constant 0 : index
    %c0_0 = arith.constant 0 : index
    %0 = vector.load %arg1[%c0, %c0_0] : memref<8x768xf32, #tpu.memory_space<vmem>>, vector<8x768xf32>
    %c0_1 = arith.constant 0 : index
    %c0_2 = arith.constant 0 : index
    %1 = vector.load %arg2[%c0_1, %c0_2] : memref<8x1xf32, #tpu.memory_space<vmem>>, vector<8x1xf32>
    %2 = vector.broadcast %1 : vector<8x1xf32> to vector<8x768xf32>
    %3 = arith.mulf %0, %2 : vector<8x768xf32>
    %c0_3 = arith.constant 0 : index
    %c0_4 = arith.constant 0 : index
    %4 = vector.load %arg3[%c0_3, %c0_4] : memref<8x1xf32, #tpu.memory_space<vmem>>, vector<8x1xf32>
    %5 = vector.broadcast %4 : vector<8x1xf32> to vector<8x768xf32>
    %6 = arith.addf %3, %5 : vector<8x768xf32>
    %cst = arith.constant 0.000000e+00 : f32
    %7 = vector.broadcast %cst : f32 to vector<8x768xf32>
    %8 = arith.maximumf %6, %7 : vector<8x768xf32>
    %c0_5 = arith.constant 0 : index
    %c0_6 = arith.constant 0 : index
    %9 = vector.load %arg4[%c0_5, %c0_6] : memref<8x768xf32, #tpu.memory_space<vmem>>, vector<8x768xf32>
    tpu.vector_store %arg4[%c0_5, %c0_6], %8 {strides = array<i32>} : memref<8x768xf32, #tpu.memory_space<vmem>>, vector<8x768xf32>,
    return
  }
  func.func @transform_0(%arg0: i32) -> (i32, i32) {
    %c0_i32 = arith.constant 0 : i32
    %c0_i32_0 = arith.constant 0 : i32
    return %c0_i32, %arg0 : i32, i32
  }
  func.func @transform_1(%arg0: i32) -> (i32, i32) {
    %c0_i32 = arith.constant 0 : i32
    %c0_i32_0 = arith.constant 0 : i32
    %c0_i32_1 = arith.constant 0 : i32
    return %c0_i32, %c0_i32_0 : i32, i32
  }
  func.func @transform_2(%arg0: i32) -> (i32, i32) {
    %c0_i32 = arith.constant 0 : i32
    %c0_i32_0 = arith.constant 0 : i32
    %c0_i32_1 = arith.constant 0 : i32
    return %c0_i32, %c0_i32_0 : i32, i32
  }
  func.func @transform_3(%arg0: i32) -> (i32, i32) {
    %c0_i32 = arith.constant 0 : i32
    %c0_i32_0 = arith.constant 0 : i32
    return %c0_i32, %arg0 : i32, i32
  }
}

module attributes {stable_mosaic.version = 11 : i64} {
  func.func @_conv_stats_kernel(%arg0: i32, %arg1: memref<72x768xbf16, #tpu.memory_space<vmem>>, %arg2: memref<8x72xbf16, #tpu.memory_space<vmem>>, %arg3: memref<8x768xf32, #tpu.memory_space<vmem>>, %arg4: memref<8x1xf32, #tpu.memory_space<vmem>>, %arg5: memref<8x1xf32, #tpu.memory_space<vmem>>) attributes {dimension_semantics = [#tpu.dimension_semantics<arbitrary>], iteration_bounds = array<i64: 1>, scalar_prefetch = 0 : i64, scratch_operands = 0 : i64, tpu.core_type = #tpu.core_type<tc>, window_params = [{transform_indices = @transform_0, window_bounds = array<i64: 72, 768>}, {pipeline_mode = #tpu.pipeline_mode<synchronous>, transform_indices = @transform_1, window_bounds = array<i64: 8, 72>}, {transform_indices = @transform_2, window_bounds = array<i64: 8, 768>}, {pipeline_mode = #tpu.pipeline_mode<synchronous>, transform_indices = @transform_3, window_bounds = array<i64: 8, 1>}, {pipeline_mode = #tpu.pipeline_mode<synchronous>, transform_indices = @transform_4, window_bounds = array<i64: 8, 1>}]} {
    %c0_i32 = arith.constant 0 : i32
    %0 = arith.cmpi eq, %arg0, %c0_i32 : i32
    %1 = arith.extui %0 : i1 to i32
    %c0_i32_0 = arith.constant 0 : i32
    %2 = arith.cmpi ne, %1, %c0_i32_0 : i32
    scf.if %2 {
      %cst_16 = arith.constant 0.000000e+00 : f32
      %18 = vector.broadcast %cst_16 : f32 to vector<8x1xf32>
      %c0_17 = arith.constant 0 : index
      %c0_18 = arith.constant 0 : index
      %19 = vector.load %arg4[%c0_17, %c0_18] : memref<8x1xf32, #tpu.memory_space<vmem>>, vector<8x1xf32>
      tpu.vector_store %arg4[%c0_17, %c0_18], %18 {strides = array<i32>} : memref<8x1xf32, #tpu.memory_space<vmem>>, vector<8x1xf32>,
      %cst_19 = arith.constant 0.000000e+00 : f32
      %20 = vector.broadcast %cst_19 : f32 to vector<8x1xf32>
      %c0_20 = arith.constant 0 : index
      %c0_21 = arith.constant 0 : index
      %21 = vector.load %arg5[%c0_20, %c0_21] : memref<8x1xf32, #tpu.memory_space<vmem>>, vector<8x1xf32>
      tpu.vector_store %arg5[%c0_20, %c0_21], %20 {strides = array<i32>} : memref<8x1xf32, #tpu.memory_space<vmem>>, vector<8x1xf32>,
    } else {
    }
    %c0 = arith.constant 0 : index
    %c0_1 = arith.constant 0 : index
    %3 = vector.load %arg2[%c0, %c0_1] : memref<8x72xbf16, #tpu.memory_space<vmem>>, vector<8x72xbf16>
    %c0_2 = arith.constant 0 : index
    %c0_3 = arith.constant 0 : index
    %4 = vector.load %arg1[%c0_2, %c0_3] : memref<72x768xbf16, #tpu.memory_space<vmem>>, vector<72x768xbf16>
    %cst = arith.constant dense<0.000000e+00> : vector<8x768xf32>
    %5 = tpu.matmul %3, %4, %cst {dimension_numbers = #tpu.dot_dimension_numbers<[1], [0], [0], [1], [0, 0, 1, 1], [], []>} : vector<8x72xbf16>, vector<72x768xbf16>, vector<8x768xf32> -> vector<8x768xf32>
    %c0_4 = arith.constant 0 : index
    %c0_5 = arith.constant 0 : index
    %6 = vector.load %arg3[%c0_4, %c0_5] : memref<8x768xf32, #tpu.memory_space<vmem>>, vector<8x768xf32>
    tpu.vector_store %arg3[%c0_4, %c0_5], %5 {strides = array<i32>} : memref<8x768xf32, #tpu.memory_space<vmem>>, vector<8x768xf32>,
    %c0_6 = arith.constant 0 : index
    %c0_7 = arith.constant 0 : index
    %7 = vector.load %arg4[%c0_6, %c0_7] : memref<8x1xf32, #tpu.memory_space<vmem>>, vector<8x1xf32>
    %cst_8 = arith.constant dense<0.000000e+00> : vector<8xf32>
    %8 = vector.multi_reduction <add>, %5, %cst_8 [1] : vector<8x768xf32> to vector<8xf32>
    %9 = vector.shape_cast %8 : vector<8xf32> to vector<8x1xf32>
    %10 = arith.addf %7, %9 : vector<8x1xf32>
    %c0_9 = arith.constant 0 : index
    %c0_10 = arith.constant 0 : index
    %11 = vector.load %arg4[%c0_9, %c0_10] : memref<8x1xf32, #tpu.memory_space<vmem>>, vector<8x1xf32>
    tpu.vector_store %arg4[%c0_9, %c0_10], %10 {strides = array<i32>} : memref<8x1xf32, #tpu.memory_space<vmem>>, vector<8x1xf32>,
    %c0_11 = arith.constant 0 : index
    %c0_12 = arith.constant 0 : index
    %12 = vector.load %arg5[%c0_11, %c0_12] : memref<8x1xf32, #tpu.memory_space<vmem>>, vector<8x1xf32>
    %13 = arith.mulf %5, %5 : vector<8x768xf32>
    %cst_13 = arith.constant dense<0.000000e+00> : vector<8xf32>
    %14 = vector.multi_reduction <add>, %13, %cst_13 [1] : vector<8x768xf32> to vector<8xf32>
    %15 = vector.shape_cast %14 : vector<8xf32> to vector<8x1xf32>
    %16 = arith.addf %12, %15 : vector<8x1xf32>
    %c0_14 = arith.constant 0 : index
    %c0_15 = arith.constant 0 : index
    %17 = vector.load %arg5[%c0_14, %c0_15] : memref<8x1xf32, #tpu.memory_space<vmem>>, vector<8x1xf32>
    tpu.vector_store %arg5[%c0_14, %c0_15], %16 {strides = array<i32>} : memref<8x1xf32, #tpu.memory_space<vmem>>, vector<8x1xf32>,
    return
  }
  func.func @transform_0(%arg0: i32) -> (i32, i32) {
    %c0_i32 = arith.constant 0 : i32
    %c0_i32_0 = arith.constant 0 : i32
    return %c0_i32, %arg0 : i32, i32
  }
  func.func @transform_1(%arg0: i32) -> (i32, i32) {
    %c0_i32 = arith.constant 0 : i32
    %c0_i32_0 = arith.constant 0 : i32
    %c0_i32_1 = arith.constant 0 : i32
    return %c0_i32, %c0_i32_0 : i32, i32
  }
  func.func @transform_2(%arg0: i32) -> (i32, i32) {
    %c0_i32 = arith.constant 0 : i32
    %c0_i32_0 = arith.constant 0 : i32
    return %c0_i32, %arg0 : i32, i32
  }
  func.func @transform_3(%arg0: i32) -> (i32, i32) {
    %c0_i32 = arith.constant 0 : i32
    %c0_i32_0 = arith.constant 0 : i32
    %c0_i32_1 = arith.constant 0 : i32
    return %c0_i32, %c0_i32_0 : i32, i32
  }
  func.func @transform_4(%arg0: i32) -> (i32, i32) {
    %c0_i32 = arith.constant 0 : i32
    %c0_i32_0 = arith.constant 0 : i32
    %c0_i32_1 = arith.constant 0 : i32
    return %c0_i32, %c0_i32_0 : i32, i32
  }
}

</mosaic_0001>

<llo_original>
// kernel: conv_block1_forward.5
$region0: #{conv_block1_forward.5}
  #allocation0 [shape = 'u32[]', space=smem, size = 0x4, offset = 0x4, fixed_abs, tag = 'smem constant byte address 0x4 - core index']
  #allocation1 [shape = 'u32[144,128]{1,0:T(1,128)}', space=vmem, size = 0x12000, scoped, tag = 'internal scratch']
  %s0 = inlined_call_operand.vmem [shape: f32[8,768], index: 0, kind: input, shape index: {}]
  %s1 = inlined_call_operand.vmem [shape: f32[8,1], index: 1, kind: input, shape index: {}]
  %s2 = inlined_call_operand.vmem [shape: f32[8,1], index: 2, kind: input, shape index: {}]
  %s3 = inlined_call_operand.vmem [shape: f32[8,768], index: 3, kind: output, shape index: {}]
  %s4 = sld [smem:[#allocation0]]
  $region22: #{conv_block1_forward.5} parent=0
    _
  %s6 = ssub.s32 1, %s4
  %s7 = scalar_select 0, %s6, %s4
  // Predicated region
  $region2: #{conv_block1_forward.5} parent=0 // pred_check
    _
  $region3: #{conv_block1_forward.5} parent=0 // pred_check_branch
    %9 = sbr.rel (0) target = $region5
  $region4: #{conv_block1_forward.5} parent=0 // pred_region
    _
  $region5: #{conv_block1_forward.5} parent=0 // pred_fallthru
    _
  // Predicated region
  $region6: #{conv_block1_forward.5} parent=0 // pred_check
    _
  $region7: #{conv_block1_forward.5} parent=0 // pred_check_branch
    %11 = sbr.rel (0) target = $region9
  $region8: #{conv_block1_forward.5} parent=0 // pred_region
    _
  $region9: #{conv_block1_forward.5} parent=0 // pred_fallthru
    _
  // Predicated region
  $region10: #{conv_block1_forward.5} parent=0 // pred_check
    _
  $region11: #{conv_block1_forward.5} parent=0 // pred_check_branch
    %13 = sbr.rel (0) target = $region13
  $region12: #{conv_block1_forward.5} parent=0 // pred_region
    _
  $region13: #{conv_block1_forward.5} parent=0 // pred_fallthru
    _
  %v14 = vld [vmem:[%s0] sm:$0xff]
  %v15 = vld [vmem:[%s0 + $0x8] sm:$0xff]
  %v16 = vld [vmem:[%s0 + $0x10] sm:$0xff]
  %v17 = vld [vmem:[%s0 + $0x18] sm:$0xff]
  %v18 = vld [vmem:[%s0 + $0x20] sm:$0xff]
  %v19 = vld [vmem:[%s0 + $0x28] sm:$0xff]
  %v20 = vld [vmem:[%s1] sm:$0xff]
  %22 = vset.pattern.permute.xlu0 0
  %23 = vperm.xlu0 %22, %v20
  %v24 = vpop.permute.xlu0 %23
  %v26 = vmul.f32 %v14, %v24
  %v27 = vmul.f32 %v15, %v24
  %v28 = vmul.f32 %v16, %v24
  %v29 = vmul.f32 %v17, %v24
  %v30 = vmul.f32 %v18, %v24
  %v31 = vmul.f32 %v19, %v24
  %v32 = vld [vmem:[%s2] sm:$0xff]
  %34 = vset.pattern.permute.xlu0 0
  %35 = vperm.xlu0 %34, %v32
  %v36 = vpop.permute.xlu0 %35
  %v38 = vadd.f32 %v26, %v36
  %v39 = vadd.f32 %v27, %v36
  %v40 = vadd.f32 %v28, %v36
  %v41 = vadd.f32 %v29, %v36
  %v42 = vadd.f32 %v30, %v36
  %v43 = vadd.f32 %v31, %v36
  %v44 = vmax.f32 %v38, 0.0
  %v45 = vmax.f32 %v39, 0.0
  %v46 = vmax.f32 %v40, 0.0
  %v47 = vmax.f32 %v41, 0.0
  %v48 = vmax.f32 %v42, 0.0
  %v49 = vmax.f32 %v43, 0.0
  %50 = vst [vmem:[%s3] sm:$0xff] %v44
  %51 = vst [vmem:[%s3 + $0x8] sm:$0xff] %v45
  %52 = vst [vmem:[%s3 + $0x10] sm:$0xff] %v46
  %53 = vst [vmem:[%s3 + $0x18] sm:$0xff] %v47
  %54 = vst [vmem:[%s3 + $0x20] sm:$0xff] %v48
  %55 = vst [vmem:[%s3 + $0x28] sm:$0xff] %v49
  // Predicated region
  $region14: #{conv_block1_forward.5} parent=0 // pred_check
    _
  $region15: #{conv_block1_forward.5} parent=0 // pred_check_branch
    %57 = sbr.rel (0) target = $region17
  $region16: #{conv_block1_forward.5} parent=0 // pred_region
    _
  $region17: #{conv_block1_forward.5} parent=0 // pred_fallthru
    _
  // Predicated region
  $region18: #{conv_block1_forward.5} parent=0 // pred_check
    _
  $region19: #{conv_block1_forward.5} parent=0 // pred_check_branch
    %59 = sbr.rel (0) target = $region21
  $region20: #{conv_block1_forward.5} parent=0 // pred_region
    _
  $region21: #{conv_block1_forward.5} parent=0 // pred_fallthru
    _

// kernel: conv_block1_forward.4
$region0: #{conv_block1_forward.4}
  #allocation0 [shape = 'u32[]', space=smem, size = 0x4, offset = 0x4, fixed_abs, tag = 'smem constant byte address 0x4 - core index']
  #allocation1 [shape = 'u32[144,128]{1,0:T(1,128)}', space=vmem, size = 0x12000, scoped, tag = 'internal scratch']
  %s0 = inlined_call_operand.vmem [shape: bf16[36,768], index: 0, kind: input, shape index: {}]
  %s1 = inlined_call_operand.vmem [shape: bf16[8,36], index: 1, kind: input, shape index: {}]
  %s2 = inlined_call_operand.vmem [shape: f32[8,768], index: 2, kind: output, shape index: {0}]
  %s3 = inlined_call_operand.vmem [shape: f32[8,1], index: 3, kind: output, shape index: {1}]
  %s4 = inlined_call_operand.vmem [shape: f32[8,1], index: 4, kind: output, shape index: {2}]
  %5 = xla_tuple %s2, %s3, %s4
  %s6 = sld [smem:[#allocation0]]
  $region38: #{conv_block1_forward.4} parent=0
    _
  %s8 = ssub.s32 1, %s6
  %s9 = scalar_select 0, %s8, %s6
  // Predicated region
  $region2: #{conv_block1_forward.4} parent=0 // pred_check
    _
  $region3: #{conv_block1_forward.4} parent=0 // pred_check_branch
    %11 = sbr.rel (0) target = $region5
  $region4: #{conv_block1_forward.4} parent=0 // pred_region
    _
  $region5: #{conv_block1_forward.4} parent=0 // pred_fallthru
    _
  // Predicated region
  $region6: #{conv_block1_forward.4} parent=0 // pred_check
    _
  $region7: #{conv_block1_forward.4} parent=0 // pred_check_branch
    %13 = sbr.rel (0) target = $region9
  $region8: #{conv_block1_forward.4} parent=0 // pred_region
    _
  $region9: #{conv_block1_forward.4} parent=0 // pred_fallthru
    _
  %p15 = scmp.eq.s32.totalorder 0, 0
  // Predicated region
  $region10: #{conv_block1_forward.4} parent=0 // pred_check
    %p16 = pneg %p15
  $region11: #{conv_block1_forward.4} parent=0 // pred_check_branch
    %18 = sbr.rel (%p16) target = $region13
  $region12: #{conv_block1_forward.4} parent=0 // pred_region
    %vm19 = vcmask 7168
    %20 = vst.msk [vmem:[%s3] sm:$0xff] %vm19, 0.0
    %21 = vst.msk [vmem:[%s4] sm:$0xff] %vm19, 0.0
  $region13: #{conv_block1_forward.4} parent=0 // pred_fallthru
    _
  %v22 = vld [vmem:[%s1] sm:$0xf]
  %v23 = vld [vmem:[%s0] sm:$0xff]
  %v24 = vld [vmem:[%s0 + $0x8] sm:$0xff]
  %v25 = vld [vmem:[%s0 + $0x10] sm:$0xff]
  %v26 = vld [vmem:[%s0 + $0x18] sm:$0xff]
  %v27 = vld [vmem:[%s0 + $0x20] sm:$0xff]
  %v28 = vld [vmem:[%s0 + $0x28] sm:$0xff]
  %v29 = vld [vmem:[%s0 + $0x30] sm:$0xff]
  %v30 = vld [vmem:[%s0 + $0x38] sm:$0xff]
  %v31 = vld [vmem:[%s0 + $0x40] sm:$0xff]
  %v32 = vld [vmem:[%s0 + $0x48] sm:$0xff]
  %v33 = vld [vmem:[%s0 + $0x50] sm:$0xff]
  %v34 = vld [vmem:[%s0 + $0x58] sm:$0xff]
  %v35 = vld [vmem:[%s0 + $0x60] sm:$0x33]
  %v36 = vld [vmem:[%s0 + $0x68] sm:$0x33]
  %v37 = vld [vmem:[%s0 + $0x70] sm:$0x33]
  %v53 = vunpack.c.l.b16 %v23
  %v54 = vunpack.c.h.b16 %v23
  %v55 = vunpack.c.l.b16 %v24
  %v56 = vunpack.c.h.b16 %v24
  %v57 = vunpack.c.l.b16 %v25
  %v58 = vunpack.c.h.b16 %v25
  %v59 = vunpack.c.l.b16 %v26
  %v60 = vunpack.c.h.b16 %v26
  %v61 = vunpack.c.l.b16 %v27
  %v62 = vunpack.c.h.b16 %v27
  %v63 = vunpack.c.l.b16 %v28
  %v64 = vunpack.c.h.b16 %v28
  %v65 = vunpack.c.l.b16 %v29
  %v66 = vunpack.c.h.b16 %v29
  %v67 = vunpack.c.l.b16 %v30
  %v68 = vunpack.c.h.b16 %v30
  %v69 = vunpack.c.l.b16 %v31
  %v70 = vunpack.c.h.b16 %v31
  %v71 = vunpack.c.l.b16 %v32
  %v72 = vunpack.c.h.b16 %v32
  %v73 = vunpack.c.l.b16 %v33
  %v74 = vunpack.c.h.b16 %v33
  %v75 = vunpack.c.l.b16 %v34
  %v76 = vunpack.c.h.b16 %v34
  %v77 = vunpack.c.l.b16 %v35
  %v78 = vunpack.c.h.b16 %v35
  %v79 = vunpack.c.l.b16 %v36
  %v80 = vunpack.c.h.b16 %v36
  %v81 = vunpack.c.l.b16 %v37
  %v82 = vunpack.c.h.b16 %v37
  %v83 = vpack.c.b16 %v59, %v53
  %v84 = vpack.c.b16 %v60, %v54
  %v85 = vpack.c.b16 %v61, %v55
  %v86 = vpack.c.b16 %v62, %v56
  %v87 = vpack.c.b16 %v63, %v57
  %v88 = vpack.c.b16 %v64, %v58
  %v89 = vpack.c.b16 %v71, %v65
  %v90 = vpack.c.b16 %v72, %v66
  %v91 = vpack.c.b16 %v73, %v67
  %v92 = vpack.c.b16 %v74, %v68
  %v93 = vpack.c.b16 %v75, %v69
  %v94 = vpack.c.b16 %v76, %v70
  %v95 = vpack.c.b16 %v77, %v77
  %v96 = vpack.c.b16 %v78, %v78
  %v97 = vpack.c.b16 %v79, %v79
  %v98 = vpack.c.b16 %v80, %v80
  %v99 = vpack.c.b16 %v81, %v81
  %v100 = vpack.c.b16 %v82, %v82
  %vm113 = vcmask 293888
  %v115 = vsel %vm113, %v22, 0
  %vm117 = vcmask 1041408
  %v119 = vsel %vm117, %v95, 0
  %v122 = vsel %vm117, %v96, 0
  %v125 = vsel %vm117, %v97, 0
  %v128 = vsel %vm117, %v98, 0
  %v131 = vsel %vm117, %v99, 0
  %v134 = vsel %vm117, %v100, 0
  %136 = vmatprep.subr.bf16.mxu0 %v84
  %137 = vmatpush1.bf16.msra.mxu0 %v83
  %138 = vmatprep.subr.bf16.mxu0 %v90
  %139 = vmatpush1.bf16.msra.mxu0 %v89
  %140 = vmatprep.subr.bf16.mxu0 %v122
  %141 = vmatpush1.bf16.msra.mxu0 %v119
  %142 = vmatprep.subr.bf16.mxu0 0
  %143 = vmatpush1.bf16.msra.mxu0 0
  %144 = vmatprep.subr.bf16.mxu0 0
  %145 = vmatpush1.bf16.msra.mxu0 0
  %146 = vmatprep.subr.bf16.mxu0 0
  %147 = vmatpush1.bf16.msra.mxu0 0
  %148 = vmatprep.subr.bf16.mxu0 0
  %149 = vmatpush1.bf16.msra.mxu0 0
  %150 = vmatprep.subr.bf16.mxu0 0
  %151 = vmatpush1.bf16.msra.mxu0 0
  %152 = vmatprep.subr.bf16.mxu0 0
  %153 = vmatpush1.bf16.msra.mxu0 0
  %154 = vmatprep.subr.bf16.mxu0 0
  %155 = vmatpush1.bf16.msra.mxu0 0
  %156 = vmatprep.subr.bf16.mxu0 0
  %157 = vmatpush1.bf16.msra.mxu0 0
  %158 = vmatprep.subr.bf16.mxu0 0
  %159 = vmatpush1.bf16.msra.mxu0 0
  %160 = vmatprep.subr.bf16.mxu0 0
  %161 = vmatpush1.bf16.msra.mxu0 0
  %162 = vmatprep.subr.bf16.mxu0 0
  %163 = vmatpush1.bf16.msra.mxu0 0
  %164 = vmatprep.subr.bf16.mxu0 0
  %165 = vmatpush1.bf16.msra.mxu0 0
  %166 = vmatprep.subr.bf16.mxu0 0
  %167 = vmatpush1.bf16.msra.mxu0 0
  %168 = vmatprep.mubr.bf16.mxu0 0
  %169 = vmatmul.mubr.bf16.gmra.mrb[0].mxu0 %v115
  %v170 = vpop.f32.mrb[0].mxu0
  %v171 = vadd.f32 0.0, %v170
  %v172 = vpop.f32.mrb[0].mxu0
  %v173 = vadd.f32 0.0, %v172
  %v174 = vpop.f32.mrb[0].mxu0
  %v175 = vpop.f32.mrb[0].mxu0
  %176 = vdwg.mxu0
  %177 = vmatprep.subr.bf16.mxu0 %v86
  %178 = vmatpush1.bf16.msra.mxu0 %v85
  %179 = vmatprep.subr.bf16.mxu0 %v92
  %180 = vmatpush1.bf16.msra.mxu0 %v91
  %181 = vmatprep.subr.bf16.mxu0 %v128
  %182 = vmatpush1.bf16.msra.mxu0 %v125
  %183 = vmatprep.subr.bf16.mxu0 0
  %184 = vmatpush1.bf16.msra.mxu0 0
  %185 = vmatprep.subr.bf16.mxu0 0
  %186 = vmatpush1.bf16.msra.mxu0 0
  %187 = vmatprep.subr.bf16.mxu0 0
  %188 = vmatpush1.bf16.msra.mxu0 0
  %189 = vmatprep.subr.bf16.mxu0 0
  %190 = vmatpush1.bf16.msra.mxu0 0
  %191 = vmatprep.subr.bf16.mxu0 0
  %192 = vmatpush1.bf16.msra.mxu0 0
  %193 = vmatprep.subr.bf16.mxu0 0
  %194 = vmatpush1.bf16.msra.mxu0 0
  %195 = vmatprep.subr.bf16.mxu0 0
  %196 = vmatpush1.bf16.msra.mxu0 0
  %197 = vmatprep.subr.bf16.mxu0 0
  %198 = vmatpush1.bf16.msra.mxu0 0
  %199 = vmatprep.subr.bf16.mxu0 0
  %200 = vmatpush1.bf16.msra.mxu0 0
  %201 = vmatprep.subr.bf16.mxu0 0
  %202 = vmatpush1.bf16.msra.mxu0 0
  %203 = vmatprep.subr.bf16.mxu0 0
  %204 = vmatpush1.bf16.msra.mxu0 0
  %205 = vmatprep.subr.bf16.mxu0 0
  %206 = vmatpush1.bf16.msra.mxu0 0
  %207 = vmatprep.subr.bf16.mxu0 0
  %208 = vmatpush1.bf16.msra.mxu0 0
  %209 = vmatprep.mubr.bf16.mxu0 0
  %210 = vmatmul.mubr.bf16.gmra.mrb[0].mxu0 %v115
  %v211 = vpop.f32.mrb[0].mxu0
  %v212 = vadd.f32 0.0, %v211
  %v213 = vpop.f32.mrb[0].mxu0
  %v214 = vadd.f32 0.0, %v213
  %v215 = vpop.f32.mrb[0].mxu0
  %v216 = vpop.f32.mrb[0].mxu0
  %217 = vdwg.mxu0
  %218 = vmatprep.subr.bf16.mxu0 %v88
  %219 = vmatpush1.bf16.msra.mxu0 %v87
  %220 = vmatprep.subr.bf16.mxu0 %v94
  %221 = vmatpush1.bf16.msra.mxu0 %v93
  %222 = vmatprep.subr.bf16.mxu0 %v134
  %223 = vmatpush1.bf16.msra.mxu0 %v131
  %224 = vmatprep.subr.bf16.mxu0 0
  %225 = vmatpush1.bf16.msra.mxu0 0
  %226 = vmatprep.subr.bf16.mxu0 0
  %227 = vmatpush1.bf16.msra.mxu0 0
  %228 = vmatprep.subr.bf16.mxu0 0
  %229 = vmatpush1.bf16.msra.mxu0 0
  %230 = vmatprep.subr.bf16.mxu0 0
  %231 = vmatpush1.bf16.msra.mxu0 0
  %232 = vmatprep.subr.bf16.mxu0 0
  %233 = vmatpush1.bf16.msra.mxu0 0
  %234 = vmatprep.subr.bf16.mxu0 0
  %235 = vmatpush1.bf16.msra.mxu0 0
  %236 = vmatprep.subr.bf16.mxu0 0
  %237 = vmatpush1.bf16.msra.mxu0 0
  %238 = vmatprep.subr.bf16.mxu0 0
  %239 = vmatpush1.bf16.msra.mxu0 0
  %240 = vmatprep.subr.bf16.mxu0 0
  %241 = vmatpush1.bf16.msra.mxu0 0
  %242 = vmatprep.subr.bf16.mxu0 0
  %243 = vmatpush1.bf16.msra.mxu0 0
  %244 = vmatprep.subr.bf16.mxu0 0
  %245 = vmatpush1.bf16.msra.mxu0 0
  %246 = vmatprep.subr.bf16.mxu0 0
  %247 = vmatpush1.bf16.msra.mxu0 0
  %248 = vmatprep.subr.bf16.mxu0 0
  %249 = vmatpush1.bf16.msra.mxu0 0
  %250 = vmatprep.mubr.bf16.mxu0 0
  %251 = vmatmul.mubr.bf16.gmra.mrb[0].mxu0 %v115
  %v252 = vpop.f32.mrb[0].mxu0
  %v253 = vadd.f32 0.0, %v252
  %v254 = vpop.f32.mrb[0].mxu0
  %v255 = vadd.f32 0.0, %v254
  %v256 = vpop.f32.mrb[0].mxu0
  %v257 = vpop.f32.mrb[0].mxu0
  %258 = vdwg.mxu0
  %259 = vst [vmem:[%s2] sm:$0xff] %v171
  %260 = vst [vmem:[%s2 + $0x8] sm:$0xff] %v173
  %261 = vst [vmem:[%s2 + $0x10] sm:$0xff] %v212
  %262 = vst [vmem:[%s2 + $0x18] sm:$0xff] %v214
  %263 = vst [vmem:[%s2 + $0x20] sm:$0xff] %v253
  %264 = vst [vmem:[%s2 + $0x28] sm:$0xff] %v255
  %v265 = vld [vmem:[%s3] sm:$0xff]
  %v266 = vadd.f32 %v171, %v173
  %v267 = vadd.f32 %v266, %v212
  %v268 = vadd.f32 %v267, %v214
  %v269 = vadd.f32 %v268, %v253
  %v270 = vadd.f32 %v269, %v255
  %271 = vadd.xlane.f32.xlu0 %v270
  %v272 = vpop.xlane.xlu0 %271
  %v273 = vadd.f32 %v265, %v272
  %vm274 = vcmask 7168
  %275 = vst.msk [vmem:[%s3] sm:$0xff] %vm274, %v273
  %v276 = vld [vmem:[%s4] sm:$0xff]
  %v277 = vmul.f32 %v171, %v171
  %v278 = vmul.f32 %v173, %v173
  %v279 = vmul.f32 %v212, %v212
  %v280 = vmul.f32 %v214, %v214
  %v281 = vmul.f32 %v253, %v253
  %v282 = vmul.f32 %v255, %v255
  %v283 = vadd.f32 %v277, %v278
  %v284 = vadd.f32 %v283, %v279
  %v285 = vadd.f32 %v284, %v280
  %v286 = vadd.f32 %v285, %v281
  %v287 = vadd.f32 %v286, %v282
  %288 = vadd.xlane.f32.xlu0 %v287
  %v289 = vpop.xlane.xlu0 %288
  %v290 = vadd.f32 %v276, %v289
  %291 = vst.msk [vmem:[%s4] sm:$0xff] %vm274, %v290
  // Predicated region
  $region14: #{conv_block1_forward.4} parent=0 // pred_check
    _
  $region15: #{conv_block1_forward.4} parent=0 // pred_check_branch
    %293 = sbr.rel (0) target = $region17
  $region16: #{conv_block1_forward.4} parent=0 // pred_region
    _
  $region17: #{conv_block1_forward.4} parent=0 // pred_fallthru
    _
  // Predicated region
  $region18: #{conv_block1_forward.4} parent=0 // pred_check
    _
  $region19: #{conv_block1_forward.4} parent=0 // pred_check_branch
    %295 = sbr.rel (0) target = $region21
  $region20: #{conv_block1_forward.4} parent=0 // pred_region
    _
  $region21: #{conv_block1_forward.4} parent=0 // pred_fallthru
    _
  // Predicated region
  $region22: #{conv_block1_forward.4} parent=0 // pred_check
    _
  $region23: #{conv_block1_forward.4} parent=0 // pred_check_branch
    %297 = sbr.rel (0) target = $region25
  $region24: #{conv_block1_forward.4} parent=0 // pred_region
    _
  $region25: #{conv_block1_forward.4} parent=0 // pred_fallthru
    _
  // Predicated region
  $region26: #{conv_block1_forward.4} parent=0 // pred_check
    _
  $region27: #{conv_block1_forward.4} parent=0 // pred_check_branch
    %299 = sbr.rel (0) target = $region29
  $region28: #{conv_block1_forward.4} parent=0 // pred_region
    _
  $region29: #{conv_block1_forward.4} parent=0 // pred_fallthru
    _
  // Predicated region
  $region30: #{conv_block1_forward.4} parent=0 // pred_check
    _
  $region31: #{conv_block1_forward.4} parent=0 // pred_check_branch
    %301 = sbr.rel (0) target = $region33
  $region32: #{conv_block1_forward.4} parent=0 // pred_region
    _
  $region33: #{conv_block1_forward.4} parent=0 // pred_fallthru
    _
  // Predicated region
  $region34: #{conv_block1_forward.4} parent=0 // pred_check
    _
  $region35: #{conv_block1_forward.4} parent=0 // pred_check_branch
    %303 = sbr.rel (0) target = $region37
  $region36: #{conv_block1_forward.4} parent=0 // pred_region
    _
  $region37: #{conv_block1_forward.4} parent=0 // pred_fallthru
    _

// kernel: conv_block1_forward.6
$region0: #{conv_block1_forward.6}
  #allocation0 [shape = 'u32[]', space=smem, size = 0x4, offset = 0x4, fixed_abs, tag = 'smem constant byte address 0x4 - core index']
  #allocation1 [shape = 'u32[144,128]{1,0:T(1,128)}', space=vmem, size = 0x12000, scoped, tag = 'internal scratch']
  %s0 = inlined_call_operand.vmem [shape: bf16[72,768], index: 0, kind: input, shape index: {}]
  %s1 = inlined_call_operand.vmem [shape: bf16[8,72], index: 1, kind: input, shape index: {}]
  %s2 = inlined_call_operand.vmem [shape: f32[8,768], index: 2, kind: output, shape index: {0}]
  %s3 = inlined_call_operand.vmem [shape: f32[8,1], index: 3, kind: output, shape index: {1}]
  %s4 = inlined_call_operand.vmem [shape: f32[8,1], index: 4, kind: output, shape index: {2}]
  %5 = xla_tuple %s2, %s3, %s4
  %s6 = sld [smem:[#allocation0]]
  $region38: #{conv_block1_forward.6} parent=0
    _
  %s8 = ssub.s32 1, %s6
  %s9 = scalar_select 0, %s8, %s6
  // Predicated region
  $region2: #{conv_block1_forward.6} parent=0 // pred_check
    _
  $region3: #{conv_block1_forward.6} parent=0 // pred_check_branch
    %11 = sbr.rel (0) target = $region5
  $region4: #{conv_block1_forward.6} parent=0 // pred_region
    _
  $region5: #{conv_block1_forward.6} parent=0 // pred_fallthru
    _
  // Predicated region
  $region6: #{conv_block1_forward.6} parent=0 // pred_check
    _
  $region7: #{conv_block1_forward.6} parent=0 // pred_check_branch
    %13 = sbr.rel (0) target = $region9
  $region8: #{conv_block1_forward.6} parent=0 // pred_region
    _
  $region9: #{conv_block1_forward.6} parent=0 // pred_fallthru
    _
  %p15 = scmp.eq.s32.totalorder 0, 0
  // Predicated region
  $region10: #{conv_block1_forward.6} parent=0 // pred_check
    %p16 = pneg %p15
  $region11: #{conv_block1_forward.6} parent=0 // pred_check_branch
    %18 = sbr.rel (%p16) target = $region13
  $region12: #{conv_block1_forward.6} parent=0 // pred_region
    %vm19 = vcmask 7168
    %20 = vst.msk [vmem:[%s3] sm:$0xff] %vm19, 0.0
    %21 = vst.msk [vmem:[%s4] sm:$0xff] %vm19, 0.0
  $region13: #{conv_block1_forward.6} parent=0 // pred_fallthru
    _
  %v22 = vld [vmem:[%s1] sm:$0xf]
  %v23 = vld [vmem:[%s0] sm:$0xff]
  %v24 = vld [vmem:[%s0 + $0x8] sm:$0xff]
  %v25 = vld [vmem:[%s0 + $0x10] sm:$0xff]
  %v26 = vld [vmem:[%s0 + $0x18] sm:$0xff]
  %v27 = vld [vmem:[%s0 + $0x20] sm:$0xff]
  %v28 = vld [vmem:[%s0 + $0x28] sm:$0xff]
  %v29 = vld [vmem:[%s0 + $0x30] sm:$0xff]
  %v30 = vld [vmem:[%s0 + $0x38] sm:$0xff]
  %v31 = vld [vmem:[%s0 + $0x40] sm:$0xff]
  %v32 = vld [vmem:[%s0 + $0x48] sm:$0xff]
  %v33 = vld [vmem:[%s0 + $0x50] sm:$0xff]
  %v34 = vld [vmem:[%s0 + $0x58] sm:$0xff]
  %v35 = vld [vmem:[%s0 + $0x60] sm:$0xff]
  %v36 = vld [vmem:[%s0 + $0x68] sm:$0xff]
  %v37 = vld [vmem:[%s0 + $0x70] sm:$0xff]
  %v38 = vld [vmem:[%s0 + $0x78] sm:$0xff]
  %v39 = vld [vmem:[%s0 + $0x80] sm:$0xff]
  %v40 = vld [vmem:[%s0 + $0x88] sm:$0xff]
  %v41 = vld [vmem:[%s0 + $0x90] sm:$0xff]
  %v42 = vld [vmem:[%s0 + $0x98] sm:$0xff]
  %v43 = vld [vmem:[%s0 + $0xa0] sm:$0xff]
  %v44 = vld [vmem:[%s0 + $0xa8] sm:$0xff]
  %v45 = vld [vmem:[%s0 + $0xb0] sm:$0xff]
  %v46 = vld [vmem:[%s0 + $0xb8] sm:$0xff]
  %v47 = vld [vmem:[%s0 + $0xc0] sm:$0xff]
  %v48 = vld [vmem:[%s0 + $0xc8] sm:$0xff]
  %v49 = vld [vmem:[%s0 + $0xd0] sm:$0xff]
  %v77 = vunpack.c.l.b16 %v23
  %v78 = vunpack.c.h.b16 %v23
  %v79 = vunpack.c.l.b16 %v24
  %v80 = vunpack.c.h.b16 %v24
  %v81 = vunpack.c.l.b16 %v25
  %v82 = vunpack.c.h.b16 %v25
  %v83 = vunpack.c.l.b16 %v26
  %v84 = vunpack.c.h.b16 %v26
  %v85 = vunpack.c.l.b16 %v27
  %v86 = vunpack.c.h.b16 %v27
  %v87 = vunpack.c.l.b16 %v28
  %v88 = vunpack.c.h.b16 %v28
  %v89 = vunpack.c.l.b16 %v29
  %v90 = vunpack.c.h.b16 %v29
  %v91 = vunpack.c.l.b16 %v30
  %v92 = vunpack.c.h.b16 %v30
  %v93 = vunpack.c.l.b16 %v31
  %v94 = vunpack.c.h.b16 %v31
  %v95 = vunpack.c.l.b16 %v32
  %v96 = vunpack.c.h.b16 %v32
  %v97 = vunpack.c.l.b16 %v33
  %v98 = vunpack.c.h.b16 %v33
  %v99 = vunpack.c.l.b16 %v34
  %v100 = vunpack.c.h.b16 %v34
  %v101 = vunpack.c.l.b16 %v35
  %v102 = vunpack.c.h.b16 %v35
  %v103 = vunpack.c.l.b16 %v36
  %v104 = vunpack.c.h.b16 %v36
  %v105 = vunpack.c.l.b16 %v37
  %v106 = vunpack.c.h.b16 %v37
  %v107 = vunpack.c.l.b16 %v38
  %v108 = vunpack.c.h.b16 %v38
  %v109 = vunpack.c.l.b16 %v39
  %v110 = vunpack.c.h.b16 %v39
  %v111 = vunpack.c.l.b16 %v40
  %v112 = vunpack.c.h.b16 %v40
  %v113 = vunpack.c.l.b16 %v41
  %v114 = vunpack.c.h.b16 %v41
  %v115 = vunpack.c.l.b16 %v42
  %v116 = vunpack.c.h.b16 %v42
  %v117 = vunpack.c.l.b16 %v43
  %v118 = vunpack.c.h.b16 %v43
  %v119 = vunpack.c.l.b16 %v44
  %v120 = vunpack.c.h.b16 %v44
  %v121 = vunpack.c.l.b16 %v45
  %v122 = vunpack.c.h.b16 %v45
  %v123 = vunpack.c.l.b16 %v46
  %v124 = vunpack.c.h.b16 %v46
  %v125 = vunpack.c.l.b16 %v47
  %v126 = vunpack.c.h.b16 %v47
  %v127 = vunpack.c.l.b16 %v48
  %v128 = vunpack.c.h.b16 %v48
  %v129 = vunpack.c.l.b16 %v49
  %v130 = vunpack.c.h.b16 %v49
  %v131 = vpack.c.b16 %v83, %v77
  %v132 = vpack.c.b16 %v84, %v78
  %v133 = vpack.c.b16 %v85, %v79
  %v134 = vpack.c.b16 %v86, %v80
  %v135 = vpack.c.b16 %v87, %v81
  %v136 = vpack.c.b16 %v88, %v82
  %v137 = vpack.c.b16 %v95, %v89
  %v138 = vpack.c.b16 %v96, %v90
  %v139 = vpack.c.b16 %v97, %v91
  %v140 = vpack.c.b16 %v98, %v92
  %v141 = vpack.c.b16 %v99, %v93
  %v142 = vpack.c.b16 %v100, %v94
  %v143 = vpack.c.b16 %v107, %v101
  %v144 = vpack.c.b16 %v108, %v102
  %v145 = vpack.c.b16 %v109, %v103
  %v146 = vpack.c.b16 %v110, %v104
  %v147 = vpack.c.b16 %v111, %v105
  %v148 = vpack.c.b16 %v112, %v106
  %v149 = vpack.c.b16 %v119, %v113
  %v150 = vpack.c.b16 %v120, %v114
  %v151 = vpack.c.b16 %v121, %v115
  %v152 = vpack.c.b16 %v122, %v116
  %v153 = vpack.c.b16 %v123, %v117
  %v154 = vpack.c.b16 %v124, %v118
  %v155 = vpack.c.b16 %v125, %v125
  %v156 = vpack.c.b16 %v126, %v126
  %v157 = vpack.c.b16 %v127, %v127
  %v158 = vpack.c.b16 %v128, %v128
  %v159 = vpack.c.b16 %v129, %v129
  %v160 = vpack.c.b16 %v130, %v130
  %vm185 = vcmask 588800
  %v187 = vsel %vm185, %v22, 0
  %vm189 = vcmask 1043456
  %v191 = vsel %vm189, %v155, 0
  %v194 = vsel %vm189, %v156, 0
  %v197 = vsel %vm189, %v157, 0
  %v200 = vsel %vm189, %v158, 0
  %v203 = vsel %vm189, %v159, 0
  %v206 = vsel %vm189, %v160, 0
  %208 = vmatprep.subr.bf16.mxu0 %v132
  %209 = vmatpush1.bf16.msra.mxu0 %v131
  %210 = vmatprep.subr.bf16.mxu0 %v138
  %211 = vmatpush1.bf16.msra.mxu0 %v137
  %212 = vmatprep.subr.bf16.mxu0 %v144
  %213 = vmatpush1.bf16.msra.mxu0 %v143
  %214 = vmatprep.subr.bf16.mxu0 %v150
  %215 = vmatpush1.bf16.msra.mxu0 %v149
  %216 = vmatprep.subr.bf16.mxu0 %v194
  %217 = vmatpush1.bf16.msra.mxu0 %v191
  %218 = vmatprep.subr.bf16.mxu0 0
  %219 = vmatpush1.bf16.msra.mxu0 0
  %220 = vmatprep.subr.bf16.mxu0 0
  %221 = vmatpush1.bf16.msra.mxu0 0
  %222 = vmatprep.subr.bf16.mxu0 0
  %223 = vmatpush1.bf16.msra.mxu0 0
  %224 = vmatprep.subr.bf16.mxu0 0
  %225 = vmatpush1.bf16.msra.mxu0 0
  %226 = vmatprep.subr.bf16.mxu0 0
  %227 = vmatpush1.bf16.msra.mxu0 0
  %228 = vmatprep.subr.bf16.mxu0 0
  %229 = vmatpush1.bf16.msra.mxu0 0
  %230 = vmatprep.subr.bf16.mxu0 0
  %231 = vmatpush1.bf16.msra.mxu0 0
  %232 = vmatprep.subr.bf16.mxu0 0
  %233 = vmatpush1.bf16.msra.mxu0 0
  %234 = vmatprep.subr.bf16.mxu0 0
  %235 = vmatpush1.bf16.msra.mxu0 0
  %236 = vmatprep.subr.bf16.mxu0 0
  %237 = vmatpush1.bf16.msra.mxu0 0
  %238 = vmatprep.subr.bf16.mxu0 0
  %239 = vmatpush1.bf16.msra.mxu0 0
  %240 = vmatprep.mubr.bf16.mxu0 0
  %241 = vmatmul.mubr.bf16.gmra.mrb[0].mxu0 %v187
  %v242 = vpop.f32.mrb[0].mxu0
  %v243 = vadd.f32 0.0, %v242
  %v244 = vpop.f32.mrb[0].mxu0
  %v245 = vadd.f32 0.0, %v244
  %v246 = vpop.f32.mrb[0].mxu0
  %v247 = vpop.f32.mrb[0].mxu0
  %248 = vdwg.mxu0
  %249 = vmatprep.subr.bf16.mxu0 %v134
  %250 = vmatpush1.bf16.msra.mxu0 %v133
  %251 = vmatprep.subr.bf16.mxu0 %v140
  %252 = vmatpush1.bf16.msra.mxu0 %v139
  %253 = vmatprep.subr.bf16.mxu0 %v146
  %254 = vmatpush1.bf16.msra.mxu0 %v145
  %255 = vmatprep.subr.bf16.mxu0 %v152
  %256 = vmatpush1.bf16.msra.mxu0 %v151
  %257 = vmatprep.subr.bf16.mxu0 %v200
  %258 = vmatpush1.bf16.msra.mxu0 %v197
  %259 = vmatprep.subr.bf16.mxu0 0
  %260 = vmatpush1.bf16.msra.mxu0 0
  %261 = vmatprep.subr.bf16.mxu0 0
  %262 = vmatpush1.bf16.msra.mxu0 0
  %263 = vmatprep.subr.bf16.mxu0 0
  %264 = vmatpush1.bf16.msra.mxu0 0
  %265 = vmatprep.subr.bf16.mxu0 0
  %266 = vmatpush1.bf16.msra.mxu0 0
  %267 = vmatprep.subr.bf16.mxu0 0
  %268 = vmatpush1.bf16.msra.mxu0 0
  %269 = vmatprep.subr.bf16.mxu0 0
  %270 = vmatpush1.bf16.msra.mxu0 0
  %271 = vmatprep.subr.bf16.mxu0 0
  %272 = vmatpush1.bf16.msra.mxu0 0
  %273 = vmatprep.subr.bf16.mxu0 0
  %274 = vmatpush1.bf16.msra.mxu0 0
  %275 = vmatprep.subr.bf16.mxu0 0
  %276 = vmatpush1.bf16.msra.mxu0 0
  %277 = vmatprep.subr.bf16.mxu0 0
  %278 = vmatpush1.bf16.msra.mxu0 0
  %279 = vmatprep.subr.bf16.mxu0 0
  %280 = vmatpush1.bf16.msra.mxu0 0
  %281 = vmatprep.mubr.bf16.mxu0 0
  %282 = vmatmul.mubr.bf16.gmra.mrb[0].mxu0 %v187
  %v283 = vpop.f32.mrb[0].mxu0
  %v284 = vadd.f32 0.0, %v283
  %v285 = vpop.f32.mrb[0].mxu0
  %v286 = vadd.f32 0.0, %v285
  %v287 = vpop.f32.mrb[0].mxu0
  %v288 = vpop.f32.mrb[0].mxu0
  %289 = vdwg.mxu0
  %290 = vmatprep.subr.bf16.mxu0 %v136
  %291 = vmatpush1.bf16.msra.mxu0 %v135
  %292 = vmatprep.subr.bf16.mxu0 %v142
  %293 = vmatpush1.bf16.msra.mxu0 %v141
  %294 = vmatprep.subr.bf16.mxu0 %v148
  %295 = vmatpush1.bf16.msra.mxu0 %v147
  %296 = vmatprep.subr.bf16.mxu0 %v154
  %297 = vmatpush1.bf16.msra.mxu0 %v153
  %298 = vmatprep.subr.bf16.mxu0 %v206
  %299 = vmatpush1.bf16.msra.mxu0 %v203
  %300 = vmatprep.subr.bf16.mxu0 0
  %301 = vmatpush1.bf16.msra.mxu0 0
  %302 = vmatprep.subr.bf16.mxu0 0
  %303 = vmatpush1.bf16.msra.mxu0 0
  %304 = vmatprep.subr.bf16.mxu0 0
  %305 = vmatpush1.bf16.msra.mxu0 0
  %306 = vmatprep.subr.bf16.mxu0 0
  %307 = vmatpush1.bf16.msra.mxu0 0
  %308 = vmatprep.subr.bf16.mxu0 0
  %309 = vmatpush1.bf16.msra.mxu0 0
  %310 = vmatprep.subr.bf16.mxu0 0
  %311 = vmatpush1.bf16.msra.mxu0 0
  %312 = vmatprep.subr.bf16.mxu0 0
  %313 = vmatpush1.bf16.msra.mxu0 0
  %314 = vmatprep.subr.bf16.mxu0 0
  %315 = vmatpush1.bf16.msra.mxu0 0
  %316 = vmatprep.subr.bf16.mxu0 0
  %317 = vmatpush1.bf16.msra.mxu0 0
  %318 = vmatprep.subr.bf16.mxu0 0
  %319 = vmatpush1.bf16.msra.mxu0 0
  %320 = vmatprep.subr.bf16.mxu0 0
  %321 = vmatpush1.bf16.msra.mxu0 0
  %322 = vmatprep.mubr.bf16.mxu0 0
  %323 = vmatmul.mubr.bf16.gmra.mrb[0].mxu0 %v187
  %v324 = vpop.f32.mrb[0].mxu0
  %v325 = vadd.f32 0.0, %v324
  %v326 = vpop.f32.mrb[0].mxu0
  %v327 = vadd.f32 0.0, %v326
  %v328 = vpop.f32.mrb[0].mxu0
  %v329 = vpop.f32.mrb[0].mxu0
  %330 = vdwg.mxu0
  %331 = vst [vmem:[%s2] sm:$0xff] %v243
  %332 = vst [vmem:[%s2 + $0x8] sm:$0xff] %v245
  %333 = vst [vmem:[%s2 + $0x10] sm:$0xff] %v284
  %334 = vst [vmem:[%s2 + $0x18] sm:$0xff] %v286
  %335 = vst [vmem:[%s2 + $0x20] sm:$0xff] %v325
  %336 = vst [vmem:[%s2 + $0x28] sm:$0xff] %v327
  %v337 = vld [vmem:[%s3] sm:$0xff]
  %v338 = vadd.f32 %v243, %v245
  %v339 = vadd.f32 %v338, %v284
  %v340 = vadd.f32 %v339, %v286
  %v341 = vadd.f32 %v340, %v325
  %v342 = vadd.f32 %v341, %v327
  %343 = vadd.xlane.f32.xlu0 %v342
  %v344 = vpop.xlane.xlu0 %343
  %v345 = vadd.f32 %v337, %v344
  %vm346 = vcmask 7168
  %347 = vst.msk [vmem:[%s3] sm:$0xff] %vm346, %v345
  %v348 = vld [vmem:[%s4] sm:$0xff]
  %v349 = vmul.f32 %v243, %v243
  %v350 = vmul.f32 %v245, %v245
  %v351 = vmul.f32 %v284, %v284
  %v352 = vmul.f32 %v286, %v286
  %v353 = vmul.f32 %v325, %v325
  %v354 = vmul.f32 %v327, %v327
  %v355 = vadd.f32 %v349, %v350
  %v356 = vadd.f32 %v355, %v351
  %v357 = vadd.f32 %v356, %v352
  %v358 = vadd.f32 %v357, %v353
  %v359 = vadd.f32 %v358, %v354
  %360 = vadd.xlane.f32.xlu0 %v359
  %v361 = vpop.xlane.xlu0 %360
  %v362 = vadd.f32 %v348, %v361
  %363 = vst.msk [vmem:[%s4] sm:$0xff] %vm346, %v362
  // Predicated region
  $region14: #{conv_block1_forward.6} parent=0 // pred_check
    _
  $region15: #{conv_block1_forward.6} parent=0 // pred_check_branch
    %365 = sbr.rel (0) target = $region17
  $region16: #{conv_block1_forward.6} parent=0 // pred_region
    _
  $region17: #{conv_block1_forward.6} parent=0 // pred_fallthru
    _
  // Predicated region
  $region18: #{conv_block1_forward.6} parent=0 // pred_check
    _
  $region19: #{conv_block1_forward.6} parent=0 // pred_check_branch
    %367 = sbr.rel (0) target = $region21
  $region20: #{conv_block1_forward.6} parent=0 // pred_region
    _
  $region21: #{conv_block1_forward.6} parent=0 // pred_fallthru
    _
  // Predicated region
  $region22: #{conv_block1_forward.6} parent=0 // pred_check
    _
  $region23: #{conv_block1_forward.6} parent=0 // pred_check_branch
    %369 = sbr.rel (0) target = $region25
  $region24: #{conv_block1_forward.6} parent=0 // pred_region
    _
  $region25: #{conv_block1_forward.6} parent=0 // pred_fallthru
    _
  // Predicated region
  $region26: #{conv_block1_forward.6} parent=0 // pred_check
    _
  $region27: #{conv_block1_forward.6} parent=0 // pred_check_branch
    %371 = sbr.rel (0) target = $region29
  $region28: #{conv_block1_forward.6} parent=0 // pred_region
    _
  $region29: #{conv_block1_forward.6} parent=0 // pred_fallthru
    _
  // Predicated region
  $region30: #{conv_block1_forward.6} parent=0 // pred_check
    _
  $region31: #{conv_block1_forward.6} parent=0 // pred_check_branch
    %373 = sbr.rel (0) target = $region33
  $region32: #{conv_block1_forward.6} parent=0 // pred_region
    _
  $region33: #{conv_block1_forward.6} parent=0 // pred_fallthru
    _
  // Predicated region
  $region34: #{conv_block1_forward.6} parent=0 // pred_check
    _
  $region35: #{conv_block1_forward.6} parent=0 // pred_check_branch
    %375 = sbr.rel (0) target = $region37
  $region36: #{conv_block1_forward.6} parent=0 // pred_region
    _
  $region37: #{conv_block1_forward.6} parent=0 // pred_fallthru
    _

</llo_original>
